<compile_context>
chip_gen: v7x
topology: tpu7x:2x2x1
jax: 0.10.0
libtpu: 0.0.40
codegen_flags: <defaults>
</compile_context>

<pallas_src>
import functools

import jax
import jax.numpy as jnp
from jax.experimental import pallas as pl
from jax.experimental.pallas import tpu as pltpu


# ---------------------------------------------------------------------------
# Kernel 1: Conv1d(k=3, pad=1) + AttentionPooling, grid = (batch, time-blocks)
# ---------------------------------------------------------------------------
def _shift_down(x_blk, head, k):
    """Return [head ; x_blk[:-k]] along the (sublane) time axis.

    `head` supplies the k rows that slide in at the top (the carry from the
    previous time block, i.e. x[t*Tb-k .. t*Tb-1]).
    """
    tb = x_blk.shape[0]
    if tb <= k:
        return head[:tb]
    # TODO(synk): build the shift with pltpu.roll(x_blk, k, axis=0) + k row
    # selects (XLU/VPU slots, idle while the MXU is busy) once sublane rolls
    # are verified on all target generations; the concat is a plain VMEM copy.
    return jnp.concatenate([head, x_blk[:tb - k, :]], axis=0)


def _conv_pool_kernel(x_ref, w_ref, b_ref, aw_ref, out_ref,
                      carry_ref, m_ref, l_ref, acc_ref, *, r_last):
    """Fused Conv1d(k=3, pad=1) + attention pooling.

    Grid is (B, NT); the time axis is a sequential reduction with an online
    softmax carried in scratch.  At step t this kernel computes conv rows
    g = t*Tb - 1 + j for j in [0, Tb) (lagged by one row so x[g+1] is always
    inside the current block); the left zero-pad is the zero-initialised
    carry.  `r_last` (static) is the number of valid x rows in the last block:
      * r_last < Tb (ragged): rows >= r_last are zeroed, so local row r_last
        computes the final conv row g = T-1 with the zero right-pad in-block;
      * r_last == Tb (divisible): g = T-1 is handled by a deferred single-row
        update, gated to the last block only.
    """
    tb, c = x_ref.shape
    t = pl.program_id(1)
    nt = pl.num_programs(1)
    last = nt - 1
    ragged = r_last < tb                              # static Python bool

    @pl.when(t == 0)
    def _():
        # zero carry == the left zero-padding of the conv
        carry_ref[...] = jnp.zeros_like(carry_ref)
        m_ref[...] = jnp.full(m_ref.shape, -jnp.inf, m_ref.dtype)
        l_ref[...] = jnp.zeros_like(l_ref)
        acc_ref[...] = jnp.zeros_like(acc_ref)

    rows = jax.lax.broadcasted_iota(jnp.int32, (tb, 1), 0)

    x_blk = x_ref[...]                                # (Tb, C)
    if ragged:
        # Zero the rows of the (partial) last block that lie past T: makes the
        # x[g+1] tap of conv row g = T-1 the zero right-padding and keeps OOB
        # garbage (possibly NaN) out of the accumulator.
        x_blk = jnp.where(jnp.logical_or(rows < r_last, t != last),
                          x_blk, jnp.zeros_like(x_blk))

    carry = carry_ref[...]                            # x[t*Tb-2], x[t*Tb-1]
    x_c = _shift_down(x_blk, carry[1:2, :], 1)        # x[g]
    x_m1 = _shift_down(x_blk, carry, 2)               # x[g-1]

    # Conv1d(k=3): three (Tb, C) x (C, C) MXU matmuls accumulated in f32
    # (no (Tb, 3C) operand materialisation, no padded score column).
    w0, w1, w2 = w_ref[0], w_ref[1], w_ref[2]
    y = (jnp.dot(x_m1, w0, preferred_element_type=jnp.float32)
         + jnp.dot(x_c, w1, preferred_element_type=jnp.float32)
         + jnp.dot(x_blk, w2, preferred_element_type=jnp.float32)
         + b_ref[...])                                # (Tb, C) f32

    # Attention score on the f32 conv output: VPU multiply + XLU lane reduce.
    # (The Linear(n_state, 1) bias shifts every score equally and the softmax
    # over time is shift-invariant, so it is dropped.)
    s = jnp.sum(y * aw_ref[...], axis=-1, keepdims=True)      # (Tb, 1) f32

    # Mask the phantom conv row g = -1 (local row 0 of the first block) and,
    # on a partial last block, the rows past the final conv row g = T-1.
    drop = jnp.logical_and(rows == 0, t == 0)
    if ragged:
        drop = jnp.logical_or(drop, jnp.logical_and(rows > r_last, t == last))
    s = jnp.where(drop, -jnp.inf, s)

    # Online softmax over time (running max / denominator / weighted sum).
    m_prev = m_ref[...]
    m_cur = jnp.maximum(m_prev, jnp.max(s, axis=0, keepdims=True))
    alpha = jnp.exp(m_prev - m_cur)
    p = jnp.exp(s - m_cur)                                     # (Tb, 1)
    l_cur = alpha * l_ref[...] + jnp.sum(p, axis=0, keepdims=True)
    acc_cur = alpha * acc_ref[...] + jnp.sum(p * y, axis=0, keepdims=True)

    m_ref[...] = m_cur
    l_ref[...] = l_cur
    acc_ref[...] = acc_cur
    carry_ref[...] = x_blk[tb - 2:, :]     # feeds the next block (unused on last)

    if ragged:
        # Final conv row g = T-1 was produced in-block; just normalise.
        @pl.when(t == last)
        def _():
            out_ref[...] = (acc_cur / l_cur).astype(out_ref.dtype)
    else:
        # T divisible by Tb: conv row g = T-1 does not fit the lag-by-one block
        # layout; deferred single-row update, executed ONLY on the last block
        # (previously this 1-row matmul ran, masked, on every block).
        @pl.when(t == last)
        def _():
            y_l = (jnp.dot(x_blk[tb - 2:tb - 1, :], w0,
                           preferred_element_type=jnp.float32)
                   + jnp.dot(x_blk[tb - 1:tb, :], w1,
                             preferred_element_type=jnp.float32)
                   + b_ref[...])                    # x[T] is the zero right-pad
            s_l = jnp.sum(y_l * aw_ref[...], axis=-1, keepdims=True)   # (1, 1)
            m_new = jnp.maximum(m_cur, s_l)
            a0 = jnp.exp(m_cur - m_new)
            a1 = jnp.exp(s_l - m_new)
            l_new = a0 * l_cur + a1
            acc_new = a0 * acc_cur + a1 * y_l
            out_ref[...] = (acc_new / l_new).astype(out_ref.dtype)


def conv_attention_pool(x, conv_w, conv_b, attn_w, attn_b=None, *,
                        t_block=256, compute_dtype=None):
    """x: (B, T, C); conv_w: (C_out, C_in, 3) torch Conv1d layout; conv_b: (C,);
    attn_w: (1, C) torch Linear(C, 1).weight; attn_b is accepted for API parity
    but unused (softmax over time is invariant to a constant score shift).
    Returns the attention-pooled conv features, shape (B, C)."""
    B, T, C = x.shape
    if T < 2:
        raise ValueError("conv_attention_pool requires T >= 2")
    dt = jnp.dtype(x.dtype) if compute_dtype is None else jnp.dtype(compute_dtype)
    if x.dtype != dt:
        # bf16 MXU feed: ideally the caller already supplies x in the compute
        # dtype so this cast (an extra HBM pass) is a no-op.
        x = x.astype(dt)

    # Time tiling: big blocks amortise per-grid-step overhead; a ragged last
    # block is handled in-kernel, so whisper-scale T (e.g. 1500) stays tiled.
    if T <= t_block:
        t_block = T                         # single block (full-dim, always legal)
    else:
        t_block = max(8, (t_block // 8) * 8)
    nt = -(-T // t_block)
    r_last = T - (nt - 1) * t_block         # valid rows in the last block (static)

    w_k = jnp.transpose(conv_w, (2, 1, 0)).astype(dt)     # (3, C_in, C_out)
    b2 = conv_b.astype(jnp.float32).reshape(1, C)         # added to the f32 acc
    aw2 = attn_w.astype(jnp.float32).reshape(1, C)        # f32 score weights

    kernel = functools.partial(_conv_pool_kernel, r_last=r_last)
    # Weights / bias / score weights are whole-array VMEM residents: one copy,
    # no per-grid-step DMA and no double-buffering of the (3, C, C) weight.
    # TODO(synk): for very large C raise vmem_limit_bytes via CompilerParams.
    # TODO(synk): for B=1 on v7x, split the time axis across the two
    # TensorCores and merge the (m, l, acc) partials in a tiny epilogue.
    out = pl.pallas_call(
        kernel,
        out_shape=jax.ShapeDtypeStruct((B, 1, C), dt),
        grid=(B, nt),
        in_specs=[
            pl.BlockSpec((None, t_block, C), lambda b, t: (b, t, 0)),
            pl.BlockSpec(memory_space=pltpu.MemorySpace.VMEM),   # (3, C, C)
            pl.BlockSpec(memory_space=pltpu.MemorySpace.VMEM),   # (1, C) bias
            pl.BlockSpec(memory_space=pltpu.MemorySpace.VMEM),   # (1, C) score w
        ],
        out_specs=pl.BlockSpec((None, 1, C), lambda b, t: (b, 0, 0)),
        scratch_shapes=[
            pltpu.VMEM((2, C), dt),             # carry: last 2 rows of prev block
            pltpu.VMEM((1, 1), jnp.float32),    # online-softmax running max
            pltpu.VMEM((1, 1), jnp.float32),    # online-softmax denominator
            pltpu.VMEM((1, C), jnp.float32),    # weighted-sum accumulator
        ],
        compiler_params=pltpu.CompilerParams(
            dimension_semantics=("parallel", "arbitrary")),
    )(x, w_k, b2, aw2)
    return out.reshape(B, C)


# ---------------------------------------------------------------------------
# Kernel 2: linear1 + softmax (1/temperature folded into the weights)
# ---------------------------------------------------------------------------
def _head_kernel(pooled_ref, w_ref, b_ref, out_ref):
    logits = jnp.dot(pooled_ref[...], w_ref[...],
                     preferred_element_type=jnp.float32) + b_ref[...]   # (B, E)
    m = jnp.max(logits, axis=-1, keepdims=True)
    e = jnp.exp(logits - m)
    out_ref[...] = (e / jnp.sum(e, axis=-1, keepdims=True)).astype(out_ref.dtype)


def router_head(pooled, lin_w, lin_b, temperature):
    """pooled: (B, Ct); lin_w: (E, Ct) torch layout; lin_b: (E,)."""
    # TODO(synk): fuse this µs-scale head into the pooling kernel's last-block
    # epilogue (or leave it to XLA) to save one launch + pooled HBM round-trip.
    B, _ = pooled.shape
    E = lin_w.shape[0]
    inv_t = 1.0 / float(temperature)        # fold 1/temperature into the weights
    w_eff = (lin_w.astype(jnp.float32) * inv_t).T.astype(pooled.dtype)  # (Ct, E)
    b_eff = (lin_b.astype(jnp.float32) * inv_t).reshape(1, E)
    return pl.pallas_call(
        _head_kernel,
        out_shape=jax.ShapeDtypeStruct((B, E), pooled.dtype),
        in_specs=[pl.BlockSpec(memory_space=pltpu.MemorySpace.VMEM)] * 3,
        out_specs=pl.BlockSpec(memory_space=pltpu.MemorySpace.VMEM),
    )(pooled, w_eff, b_eff)


# ---------------------------------------------------------------------------
# Router: parameter init + forward
# ---------------------------------------------------------------------------
def init_router_params(key, n_state, n_expert, cross_attention=False):
    ks = jax.random.split(key, 10)

    def uni(k, shape, bound):
        return jax.random.uniform(k, shape, jnp.float32, -bound, bound)

    s_conv = 1.0 / (n_state * 3) ** 0.5
    s_lin = 1.0 / n_state ** 0.5
    in_dim = 2 * n_state if cross_attention else n_state
    s1 = 1.0 / in_dim ** 0.5

    p = {
        "attn_conv_w": uni(ks[0], (n_state, n_state, 3), s_conv),
        "attn_conv_b": uni(ks[1], (n_state,), s_conv),
        "attn_pool_w": uni(ks[2], (1, n_state), s_lin),
        "attn_pool_b": uni(ks[3], (1,), s_lin),
        "linear1_w": uni(ks[4], (n_expert, in_dim), s1),
        "linear1_b": uni(ks[5], (n_expert,), s1),
    }
    if cross_attention:
        p["cross_attn_conv_w"] = uni(ks[6], (n_state, n_state, 3), s_conv)
        p["cross_attn_conv_b"] = uni(ks[7], (n_state,), s_conv)
        p["cross_attn_pool_w"] = uni(ks[8], (1, n_state), s_lin)
        p["cross_attn_pool_b"] = uni(ks[9], (1,), s_lin)
    return p


def router_forward(params, x, xa=None, *, temperature=1.0, t_block=256,
                   compute_dtype=None):
    pooled = conv_attention_pool(x, params["attn_conv_w"], params["attn_conv_b"],
                                 params["attn_pool_w"], params["attn_pool_b"],
                                 t_block=t_block, compute_dtype=compute_dtype)
    if xa is not None:
        pooled_xa = conv_attention_pool(xa, params["cross_attn_conv_w"],
                                        params["cross_attn_conv_b"],
                                        params["cross_attn_pool_w"],
                                        params["cross_attn_pool_b"],
                                        t_block=t_block,
                                        compute_dtype=compute_dtype)
        pooled = jnp.concatenate([pooled, pooled_xa], axis=1)
    return router_head(pooled, params["linear1_w"], params["linear1_b"], temperature)


# ---------------------------------------------------------------------------
# Pure-JAX reference (for correctness check)
# ---------------------------------------------------------------------------
def router_reference(params, x, xa=None, *, temperature=1.0):
    def conv_pool(x, cw, cb, aw, ab):
        xc = jnp.transpose(x, (0, 2, 1))                           # (B, C, T)
        y = jax.lax.conv_general_dilated(
            xc, cw, window_strides=(1,), padding=((1, 1),),
            dimension_numbers=("NCH", "OIH", "NCH")) + cb[None, :, None]
        y = jnp.transpose(y, (0, 2, 1))                            # (B, T, C)
        scores = y @ aw.T + ab                                     # (B, T, 1)
        w = jax.nn.softmax(scores, axis=1)
        return jnp.sum(w * y, axis=1)                              # (B, C)

    pooled = conv_pool(x, params["attn_conv_w"], params["attn_conv_b"],
                       params["attn_pool_w"], params["attn_pool_b"])
    if xa is not None:
        pooled_xa = conv_pool(xa, params["cross_attn_conv_w"],
                              params["cross_attn_conv_b"],
                              params["cross_attn_pool_w"],
                              params["cross_attn_pool_b"])
        pooled = jnp.concatenate([pooled, pooled_xa], axis=1)
    logits = pooled @ params["linear1_w"].T + params["linear1_b"]
    return jax.nn.softmax(logits / temperature, axis=-1)


if __name__ == "__main__":
    # T=200 with t_block=64 exercises the ragged tiled path (nt=4, r_last=8);
    # T_xa=128 with t_block=64 exercises the divisible path (deferred last row);
    # default t_block=256 exercises the single full-T block path.
    B, T, T_xa, n_state, n_expert = 2, 200, 128, 128, 4
    temperature = 0.7

    key = jax.random.PRNGKey(0)
    kx, kxa, kp1, kp2 = jax.random.split(key, 4)
    x = jax.random.normal(kx, (B, T, n_state), jnp.float32)
    xa = jax.random.normal(kxa, (B, T_xa, n_state), jnp.float32)

    p_self = init_router_params(kp1, n_state, n_expert, cross_attention=False)
    p_cross = init_router_params(kp2, n_state, n_expert, cross_attention=True)

    ref_self = router_reference(p_self, x, temperature=temperature)
    ref_cross = router_reference(p_cross, x, xa, temperature=temperature)

    # 1) self-attention-only router, ragged tiled path
    out_self = jax.block_until_ready(
        router_forward(p_self, x, temperature=temperature, t_block=64))
    assert out_self.shape == (B, n_expert)
    assert jnp.allclose(out_self, ref_self, atol=1e-4, rtol=1e-4), (
        float(jnp.max(jnp.abs(out_self - ref_self))))

    # 2) cross-attention router: ragged path for x + divisible path for xa
    out_cross = jax.block_until_ready(
        router_forward(p_cross, x, xa, temperature=temperature, t_block=64))
    assert out_cross.shape == (B, n_expert)
    assert jnp.allclose(out_cross, ref_cross, atol=1e-4, rtol=1e-4), (
        float(jnp.max(jnp.abs(out_cross - ref_cross))))

    # 3) single full-T block path (default t_block=256 >= T)
    out_self_1b = jax.block_until_ready(
        router_forward(p_self, x, temperature=temperature))
    assert jnp.allclose(out_self_1b, ref_self, atol=1e-4, rtol=1e-4), (
        float(jnp.max(jnp.abs(out_self_1b - ref_self))))

    # 4) bf16 MXU-feed path (lower precision by construction -> loose tolerance)
    out_bf16 = jax.block_until_ready(
        router_forward(p_cross, x, xa, temperature=temperature, t_block=64,
                       compute_dtype=jnp.bfloat16))
    assert out_bf16.dtype == jnp.bfloat16
    diff = jnp.max(jnp.abs(out_bf16.astype(jnp.float32) - ref_cross))
    assert jnp.allclose(out_bf16.astype(jnp.float32), ref_cross,
                        atol=5e-2, rtol=5e-2), float(diff)

    assert jnp.allclose(jnp.sum(out_self, axis=-1), 1.0, atol=1e-5)
    assert jnp.allclose(jnp.sum(out_cross, axis=-1), 1.0, atol=1e-5)
    assert jnp.allclose(jnp.sum(out_bf16.astype(jnp.float32), axis=-1), 1.0,
                        atol=2e-2)

    print("KERNEL_OK")
</pallas_src>

<mosaic_0001>
module attributes {stable_mosaic.version = 11 : i64} {
  func.func @_conv_pool_kernel(%arg0: i32, %arg1: i32, %arg2: memref<1x64x128xf32, #tpu.memory_space<vmem>>, %arg3: memref<3x128x128xf32, #tpu.memory_space<vmem>>, %arg4: memref<1x128xf32, #tpu.memory_space<vmem>>, %arg5: memref<1x128xf32, #tpu.memory_space<vmem>>, %arg6: memref<1x1x128xf32, #tpu.memory_space<vmem>>, %arg7: memref<2x128xf32, #tpu.memory_space<vmem>>, %arg8: memref<1x1xf32, #tpu.memory_space<vmem>>, %arg9: memref<1x1xf32, #tpu.memory_space<vmem>>, %arg10: memref<1x128xf32, #tpu.memory_space<vmem>>) attributes {dimension_semantics = [#tpu.dimension_semantics<parallel>, #tpu.dimension_semantics<arbitrary>], iteration_bounds = array<i64: 2, 4>, scalar_prefetch = 0 : i64, scratch_operands = 4 : i64, tpu.core_type = #tpu.core_type<tc>, window_params = [{transform_indices = @transform_0, window_bounds = array<i64: 1, 64, 128>}, {pipeline_mode = #tpu.pipeline_mode<synchronous>, transform_indices = @transform_1, window_bounds = array<i64: 3, 128, 128>}, {pipeline_mode = #tpu.pipeline_mode<synchronous>, transform_indices = @transform_2, window_bounds = array<i64: 1, 128>}, {pipeline_mode = #tpu.pipeline_mode<synchronous>, transform_indices = @transform_3, window_bounds = array<i64: 1, 128>}, {transform_indices = @transform_4, window_bounds = array<i64: 1, 1, 128>}]} {
    %c0_i32 = arith.constant 0 : i32
    %0 = arith.cmpi eq, %arg1, %c0_i32 : i32
    %1 = arith.extui %0 : i1 to i32
    %c0_i32_0 = arith.constant 0 : i32
    %2 = arith.cmpi ne, %1, %c0_i32_0 : i32
    scf.if %2 {
      %cst_44 = arith.constant 0.000000e+00 : f32
      %83 = vector.broadcast %cst_44 : f32 to vector<2x128xf32>
      %c0_45 = arith.constant 0 : index
      %c0_46 = arith.constant 0 : index
      %84 = vector.load %arg7[%c0_45, %c0_46] : memref<2x128xf32, #tpu.memory_space<vmem>>, vector<2x128xf32>
      tpu.vector_store %arg7[%c0_45, %c0_46], %83 {strides = array<i32>} : memref<2x128xf32, #tpu.memory_space<vmem>>, vector<2x128xf32>,
      %cst_47 = arith.constant 0xFF800000 : f32
      %85 = vector.broadcast %cst_47 : f32 to vector<1x1xf32>
      %c0_48 = arith.constant 0 : index
      %c0_49 = arith.constant 0 : index
      %86 = vector.load %arg8[%c0_48, %c0_49] : memref<1x1xf32, #tpu.memory_space<vmem>>, vector<1x1xf32>
      tpu.vector_store %arg8[%c0_48, %c0_49], %85 {strides = array<i32>} : memref<1x1xf32, #tpu.memory_space<vmem>>, vector<1x1xf32>,
      %cst_50 = arith.constant 0.000000e+00 : f32
      %87 = vector.broadcast %cst_50 : f32 to vector<1x1xf32>
      %c0_51 = arith.constant 0 : index
      %c0_52 = arith.constant 0 : index
      %88 = vector.load %arg9[%c0_51, %c0_52] : memref<1x1xf32, #tpu.memory_space<vmem>>, vector<1x1xf32>
      tpu.vector_store %arg9[%c0_51, %c0_52], %87 {strides = array<i32>} : memref<1x1xf32, #tpu.memory_space<vmem>>, vector<1x1xf32>,
      %cst_53 = arith.constant 0.000000e+00 : f32
      %89 = vector.broadcast %cst_53 : f32 to vector<1x128xf32>
      %c0_54 = arith.constant 0 : index
      %c0_55 = arith.constant 0 : index
      %90 = vector.load %arg10[%c0_54, %c0_55] : memref<1x128xf32, #tpu.memory_space<vmem>>, vector<1x128xf32>
      tpu.vector_store %arg10[%c0_54, %c0_55], %89 {strides = array<i32>} : memref<1x128xf32, #tpu.memory_space<vmem>>, vector<1x128xf32>,
    } else {
    }
    %3 = tpu.iota {dimensions = array<i32: 0>} : vector<64x1xi32>
    %c0 = arith.constant 0 : index
    %c0_1 = arith.constant 0 : index
    %c0_2 = arith.constant 0 : index
    %4 = vector.load %arg2[%c0, %c0_1, %c0_2] : memref<1x64x128xf32, #tpu.memory_space<vmem>>, vector<1x64x128xf32>
    %5 = vector.shape_cast %4 : vector<1x64x128xf32> to vector<64x128xf32>
    %c8_i32 = arith.constant 8 : i32
    %6 = vector.broadcast %c8_i32 : i32 to vector<64x1xi32>
    %7 = arith.cmpi slt, %3, %6 : vector<64x1xi32>
    %c3_i32 = arith.constant 3 : i32
    %8 = arith.cmpi ne, %arg1, %c3_i32 : i32
    %9 = vector.broadcast %8 : i1 to vector<64x1xi1>
    %10 = arith.ori %7, %9 : vector<64x1xi1>
    %cst = arith.constant 0.000000e+00 : f32
    %11 = vector.broadcast %cst : f32 to vector<64x128xf32>
    %12 = vector.shape_cast %10 : vector<64x1xi1> to vector<64x1xi1>
    %13 = vector.broadcast %12 : vector<64x1xi1> to vector<64x128xi1>
    %14 = arith.select %13, %5, %11 : vector<64x128xi1>, vector<64x128xf32>
    %c0_3 = arith.constant 0 : index
    %c0_4 = arith.constant 0 : index
    %15 = vector.load %arg7[%c0_3, %c0_4] : memref<2x128xf32, #tpu.memory_space<vmem>>, vector<2x128xf32>
    %16 = vector.extract_strided_slice %15 {offsets = [1, 0], sizes = [1, 128], strides = [1, 1]} : vector<2x128xf32> to vector<1x128xf32>
    %17 = vector.extract_strided_slice %14 {offsets = [0, 0], sizes = [63, 128], strides = [1, 1]} : vector<64x128xf32> to vector<63x128xf32>
    %18 = tpu.concatenate %16, %17 in 0 : vector<1x128xf32>, vector<63x128xf32> -> vector<64x128xf32>
    %19 = vector.extract_strided_slice %14 {offsets = [0, 0], sizes = [62, 128], strides = [1, 1]} : vector<64x128xf32> to vector<62x128xf32>
    %20 = tpu.concatenate %15, %19 in 0 : vector<2x128xf32>, vector<62x128xf32> -> vector<64x128xf32>
    %c0_5 = arith.constant 0 : index
    %c0_6 = arith.constant 0 : index
    %c0_7 = arith.constant 0 : index
    %21 = vector.load %arg3[%c0_5, %c0_6, %c0_7] : memref<3x128x128xf32, #tpu.memory_space<vmem>>, vector<1x128x128xf32>
    %22 = vector.shape_cast %21 : vector<1x128x128xf32> to vector<128x128xf32>
    %c1 = arith.constant 1 : index
    %c0_8 = arith.constant 0 : index
    %c0_9 = arith.constant 0 : index
    %23 = vector.load %arg3[%c1, %c0_8, %c0_9] : memref<3x128x128xf32, #tpu.memory_space<vmem>>, vector<1x128x128xf32>
    %24 = vector.shape_cast %23 : vector<1x128x128xf32> to vector<128x128xf32>
    %c2 = arith.constant 2 : index
    %c0_10 = arith.constant 0 : index
    %c0_11 = arith.constant 0 : index
    %25 = vector.load %arg3[%c2, %c0_10, %c0_11] : memref<3x128x128xf32, #tpu.memory_space<vmem>>, vector<1x128x128xf32>
    %26 = vector.shape_cast %25 : vector<1x128x128xf32> to vector<128x128xf32>
    %cst_12 = arith.constant dense<0.000000e+00> : vector<64x128xf32>
    %27 = tpu.matmul %20, %22, %cst_12 {dimension_numbers = #tpu.dot_dimension_numbers<[1], [0], [0], [1], [0, 0, 1, 1], [], []>} : vector<64x128xf32>, vector<128x128xf32>, vector<64x128xf32> -> vector<64x128xf32>
    %cst_13 = arith.constant dense<0.000000e+00> : vector<64x128xf32>
    %28 = tpu.matmul %18, %24, %cst_13 {dimension_numbers = #tpu.dot_dimension_numbers<[1], [0], [0], [1], [0, 0, 1, 1], [], []>} : vector<64x128xf32>, vector<128x128xf32>, vector<64x128xf32> -> vector<64x128xf32>
    %29 = arith.addf %27, %28 : vector<64x128xf32>
    %cst_14 = arith.constant dense<0.000000e+00> : vector<64x128xf32>
    %30 = tpu.matmul %14, %26, %cst_14 {dimension_numbers = #tpu.dot_dimension_numbers<[1], [0], [0], [1], [0, 0, 1, 1], [], []>} : vector<64x128xf32>, vector<128x128xf32>, vector<64x128xf32> -> vector<64x128xf32>
    %31 = arith.addf %29, %30 : vector<64x128xf32>
    %c0_15 = arith.constant 0 : index
    %c0_16 = arith.constant 0 : index
    %32 = vector.load %arg4[%c0_15, %c0_16] : memref<1x128xf32, #tpu.memory_space<vmem>>, vector<1x128xf32>
    %33 = vector.broadcast %32 : vector<1x128xf32> to vector<64x128xf32>
    %34 = arith.addf %31, %33 : vector<64x128xf32>
    %c0_17 = arith.constant 0 : index
    %c0_18 = arith.constant 0 : index
    %35 = vector.load %arg5[%c0_17, %c0_18] : memref<1x128xf32, #tpu.memory_space<vmem>>, vector<1x128xf32>
    %36 = vector.broadcast %35 : vector<1x128xf32> to vector<64x128xf32>
    %37 = arith.mulf %34, %36 : vector<64x128xf32>
    %cst_19 = arith.constant dense<0.000000e+00> : vector<64xf32>
    %38 = vector.multi_reduction <add>, %37, %cst_19 [1] : vector<64x128xf32> to vector<64xf32>
    %39 = vector.shape_cast %38 : vector<64xf32> to vector<64x1xf32>
    %c0_i32_20 = arith.constant 0 : i32
    %40 = vector.broadcast %c0_i32_20 : i32 to vector<64x1xi32>
    %41 = arith.cmpi eq, %3, %40 : vector<64x1xi32>
    %c0_i32_21 = arith.constant 0 : i32
    %42 = arith.cmpi eq, %arg1, %c0_i32_21 : i32
    %43 = vector.broadcast %42 : i1 to vector<64x1xi1>
    %44 = arith.andi %41, %43 : vector<64x1xi1>
    %c8_i32_22 = arith.constant 8 : i32
    %45 = vector.broadcast %c8_i32_22 : i32 to vector<64x1xi32>
    %46 = arith.cmpi sgt, %3, %45 : vector<64x1xi32>
    %c3_i32_23 = arith.constant 3 : i32
    %47 = arith.cmpi eq, %arg1, %c3_i32_23 : i32
    %48 = vector.broadcast %47 : i1 to vector<64x1xi1>
    %49 = arith.andi %46, %48 : vector<64x1xi1>
    %50 = arith.ori %44, %49 : vector<64x1xi1>
    %cst_24 = arith.constant 0xFF800000 : f32
    %51 = vector.broadcast %cst_24 : f32 to vector<64x1xf32>
    %52 = arith.select %50, %51, %39 : vector<64x1xi1>, vector<64x1xf32>
    %c0_25 = arith.constant 0 : index
    %c0_26 = arith.constant 0 : index
    %53 = vector.load %arg8[%c0_25, %c0_26] : memref<1x1xf32, #tpu.memory_space<vmem>>, vector<1x1xf32>
    %cst_27 = arith.constant dense<0xFF800000> : vector<1xf32>
    %54 = vector.multi_reduction <maximumf>, %52, %cst_27 [0] : vector<64x1xf32> to vector<1xf32>
    %55 = vector.shape_cast %54 : vector<1xf32> to vector<1x1xf32>
    %56 = arith.maximumf %53, %55 : vector<1x1xf32>
    %57 = arith.subf %53, %56 : vector<1x1xf32>
    %58 = math.exp %57 : vector<1x1xf32>
    %59 = vector.broadcast %56 : vector<1x1xf32> to vector<64x1xf32>
    %60 = arith.subf %52, %59 : vector<64x1xf32>
    %61 = math.exp %60 : vector<64x1xf32>
    %c0_28 = arith.constant 0 : index
    %c0_29 = arith.constant 0 : index
    %62 = vector.load %arg9[%c0_28, %c0_29] : memref<1x1xf32, #tpu.memory_space<vmem>>, vector<1x1xf32>
    %63 = arith.mulf %58, %62 : vector<1x1xf32>
    %cst_30 = arith.constant dense<0.000000e+00> : vector<1xf32>
    %64 = vector.multi_reduction <add>, %61, %cst_30 [0] : vector<64x1xf32> to vector<1xf32>
    %65 = vector.shape_cast %64 : vector<1xf32> to vector<1x1xf32>
    %66 = arith.addf %63, %65 : vector<1x1xf32>
    %c0_31 = arith.constant 0 : index
    %c0_32 = arith.constant 0 : index
    %67 = vector.load %arg10[%c0_31, %c0_32] : memref<1x128xf32, #tpu.memory_space<vmem>>, vector<1x128xf32>
    %68 = vector.broadcast %58 : vector<1x1xf32> to vector<1x128xf32>
    %69 = arith.mulf %68, %67 : vector<1x128xf32>
    %70 = vector.broadcast %61 : vector<64x1xf32> to vector<64x128xf32>
    %71 = arith.mulf %70, %34 : vector<64x128xf32>
    %cst_33 = arith.constant dense<0.000000e+00> : vector<128xf32>
    %72 = vector.multi_reduction <add>, %71, %cst_33 [0] : vector<64x128xf32> to vector<128xf32>
    %73 = vector.shape_cast %72 : vector<128xf32> to vector<1x128xf32>
    %74 = arith.addf %69, %73 : vector<1x128xf32>
    %c0_34 = arith.constant 0 : index
    %c0_35 = arith.constant 0 : index
    %75 = vector.load %arg8[%c0_34, %c0_35] : memref<1x1xf32, #tpu.memory_space<vmem>>, vector<1x1xf32>
    tpu.vector_store %arg8[%c0_34, %c0_35], %56 {strides = array<i32>} : memref<1x1xf32, #tpu.memory_space<vmem>>, vector<1x1xf32>,
    %c0_36 = arith.constant 0 : index
    %c0_37 = arith.constant 0 : index
    %76 = vector.load %arg9[%c0_36, %c0_37] : memref<1x1xf32, #tpu.memory_space<vmem>>, vector<1x1xf32>
    tpu.vector_store %arg9[%c0_36, %c0_37], %66 {strides = array<i32>} : memref<1x1xf32, #tpu.memory_space<vmem>>, vector<1x1xf32>,
    %c0_38 = arith.constant 0 : index
    %c0_39 = arith.constant 0 : index
    %77 = vector.load %arg10[%c0_38, %c0_39] : memref<1x128xf32, #tpu.memory_space<vmem>>, vector<1x128xf32>
    tpu.vector_store %arg10[%c0_38, %c0_39], %74 {strides = array<i32>} : memref<1x128xf32, #tpu.memory_space<vmem>>, vector<1x128xf32>,
    %78 = vector.extract_strided_slice %14 {offsets = [62, 0], sizes = [2, 128], strides = [1, 1]} : vector<64x128xf32> to vector<2x128xf32>
    %c0_40 = arith.constant 0 : index
    %c0_41 = arith.constant 0 : index
    %79 = vector.load %arg7[%c0_40, %c0_41] : memref<2x128xf32, #tpu.memory_space<vmem>>, vector<2x128xf32>
    tpu.vector_store %arg7[%c0_40, %c0_41], %78 {strides = array<i32>} : memref<2x128xf32, #tpu.memory_space<vmem>>, vector<2x128xf32>,
    %c3_i32_42 = arith.constant 3 : i32
    %80 = arith.cmpi eq, %arg1, %c3_i32_42 : i32
    %81 = arith.extui %80 : i1 to i32
    %c0_i32_43 = arith.constant 0 : i32
    %82 = arith.cmpi ne, %81, %c0_i32_43 : i32
    scf.if %82 {
      %83 = vector.broadcast %66 : vector<1x1xf32> to vector<1x128xf32>
      %84 = arith.divf %74, %83 : vector<1x128xf32>
      %c0_44 = arith.constant 0 : index
      %c0_45 = arith.constant 0 : index
      %c0_46 = arith.constant 0 : index
      %85 = vector.load %arg6[%c0_44, %c0_45, %c0_46] : memref<1x1x128xf32, #tpu.memory_space<vmem>>, vector<1x1x128xf32>
      %86 = vector.shape_cast %85 : vector<1x1x128xf32> to vector<1x128xf32>
      %87 = vector.shape_cast %84 : vector<1x128xf32> to vector<1x1x128xf32>
      tpu.vector_store %arg6[%c0_44, %c0_45, %c0_46], %87 {strides = array<i32>} : memref<1x1x128xf32, #tpu.memory_space<vmem>>, vector<1x1x128xf32>,
    } else {
    }
    return
  }
  func.func @transform_0(%arg0: i32, %arg1: i32) -> (i32, i32, i32) {
    %c0_i32 = arith.constant 0 : i32
    %c0_i32_0 = arith.constant 0 : i32
    return %arg0, %arg1, %c0_i32 : i32, i32, i32
  }
  func.func @transform_1(%arg0: i32, %arg1: i32) -> (i32, i32, i32) {
    %c0_i32 = arith.constant 0 : i32
    %c0_i32_0 = arith.constant 0 : i32
    %c0_i32_1 = arith.constant 0 : i32
    %c0_i32_2 = arith.constant 0 : i32
    return %c0_i32, %c0_i32_0, %c0_i32_1 : i32, i32, i32
  }
  func.func @transform_2(%arg0: i32, %arg1: i32) -> (i32, i32) {
    %c0_i32 = arith.constant 0 : i32
    %c0_i32_0 = arith.constant 0 : i32
    %c0_i32_1 = arith.constant 0 : i32
    return %c0_i32, %c0_i32_0 : i32, i32
  }
  func.func @transform_3(%arg0: i32, %arg1: i32) -> (i32, i32) {
    %c0_i32 = arith.constant 0 : i32
    %c0_i32_0 = arith.constant 0 : i32
    %c0_i32_1 = arith.constant 0 : i32
    return %c0_i32, %c0_i32_0 : i32, i32
  }
  func.func @transform_4(%arg0: i32, %arg1: i32) -> (i32, i32, i32) {
    %c0_i32 = arith.constant 0 : i32
    %c0_i32_0 = arith.constant 0 : i32
    %c0_i32_1 = arith.constant 0 : i32
    return %arg0, %c0_i32, %c0_i32_0 : i32, i32, i32
  }
}

</mosaic_0001>

<llo_original>
// kernel: tpu_custom_call.1
$region0: #{tpu_custom_call.1}
  #allocation0 [shape = 'u32[]', space=smem, size = 0x4, offset = 0x4, fixed_abs, tag = 'smem constant byte address 0x4 - core index']
  #allocation1 [shape = 'u32[144,128]{1,0:T(1,128)}', space=vmem, size = 0x12000, scoped, tag = 'internal scratch']
  #allocation2 [shape = 'f32[2,128]{1,0:T(2,128)}', space=vmem, size = 0x400, scoped, tag = 'scratch operand']
  #allocation3 [shape = 'f32[1,1]{1,0:T(1,128)}', space=vmem, size = 0x200, scoped, tag = 'scratch operand']
  #allocation4 [shape = 'f32[1,1]{1,0:T(1,128)}', space=vmem, size = 0x200, scoped, tag = 'scratch operand']
  #allocation5 [shape = 'f32[1,128]{1,0:T(1,128)}', space=vmem, size = 0x200, scoped, tag = 'scratch operand']
  %s0 = inlined_call_operand.hbm [shape: f32[2,200,128], index: 0, kind: input, shape index: {}]
  %s1 = inlined_call_operand.hbm [shape: f32[3,128,128], index: 1, kind: input, shape index: {}]
  %s2 = inlined_call_operand.vmem [shape: f32[1,128], index: 2, kind: input, shape index: {}]
  %s3 = inlined_call_operand.vmem [shape: f32[1,128], index: 3, kind: input, shape index: {}]
  %s4 = inlined_call_operand.hbm [shape: f32[2,1,128], index: 4, kind: output, shape index: {}]
  %s5 = sld [smem:[#allocation0]]
  $region65: #{tpu_custom_call.1} parent=0
    _
  %s7 = ssub.s32 1, %s5
  %s8 = scalar_select 0, %s7, %s5
  $region1: #{tpu_custom_call.1} parent=0
    #allocation6 [shape = 'u8[65536]{0}', space=vmem, size = 0x10000, scoped, tag = 'input window, operand 0']
    #allocation7 [shape = 's32[2]{0}', space=sflag, size = 0x8, scoped, tag = 'scoped memory for tpu_custom_call.1']
    #allocation8 [shape = 's32[2]{0}', space=sflag, size = 0x8, scoped, tag = 'scoped memory for tpu_custom_call.1']
    #allocation9 [shape = 'u8[196608]{0}', space=vmem, size = 0x30000, scoped, tag = 'input window, operand 1, single buffered']
    #allocation10 [shape = 's32[1]{0}', space=sflag, size = 0x4, scoped, tag = 'scoped memory for tpu_custom_call.1']
    #allocation11 [shape = 'u8[1024]{0}', space=vmem, size = 0x400, scoped, tag = 'output window, operand 0']
    %9 = vsyncpa [#allocation7], 0
    %s10 = scalar_lea.sflag [#allocation7], 1
    %11 = vsyncpa %s10, 0
    %12 = vsyncpa [#allocation10], 0
    %13 = vsyncpa [#allocation8], 0
    %s14 = scalar_lea.sflag [#allocation8], 1
    %15 = vsyncpa %s14, 0
    loop: start=0, step=1, limit=10
    $region2: #{tpu_custom_call.1} parent=1 // loop_pre_header
      _
    $region3: #{tpu_custom_call.1} parent=1 // loop_header
      %s17 = sphi 0, %s21
      %p18 = scmp.ge.s32.totalorder %s17, 10
      %s24 = sphi 0, %s36
      %s25 = sphi 0, %s32
      %s26 = sphi 0, %s24
      %s27 = sphi 0, %s25
      %s28 = sphi 0, %s26
      %s29 = sphi 0, %s27
      %s41 = sphi 0, %s43
      %s44 = sphi 0, %s41
      %s45 = sphi 0, %s44
      %s61 = sphi 0, %s45
      %s65 = sphi 0, %s65
      %s67 = sphi 0, %s65
      %s68 = sphi 0, %s67
      %s82 = sphi 0, %s68
      %s86 = sphi 0, %s86
      %s88 = sphi 0, %s86
      %s89 = sphi 0, %s88
      %s103 = sphi 0, %s89
      %s107 = sphi 0, %s107
      %s109 = sphi 0, %s107
      %s110 = sphi 0, %s109
      %s124 = sphi 0, %s110
      %s130 = sphi 0, %s132
      %s133 = sphi 0, %s130
      %s134 = sphi 0, %s133
      %s150 = sphi 0, %s134
    $region4: #{tpu_custom_call.1} parent=1 // loop_header_branch
      %20 = sbr.rel (%p18) target = $region8
    $region5: #{tpu_custom_call.1} parent=1 // loop_body
      %s22 = ssub.s32 %s17, 1
      %s23 = ssub.s32 %s17, 2
      %s30 = sadd.s32 1, %s25
      %p31 = scmp.ge.s32.totalorder %s30, 4
      %s32 = scalar_select %p31, 0, %s30
      %s33 = sadd.s32 1, %s24
      %s34 = scalar_select %p31, %s33, %s24
      %p35 = scmp.ge.s32.totalorder %s34, 2
      %s36 = scalar_select %p35, 0, %s34
      %s37 = ssub.s32 %s24, %s36
      %s38 = ssub.s32 %s25, %s32
      %s39 = sor.u32 %s37, %s38
      %p40 = scmp.eq.s32.totalorder %s39, 0
      %s42 = sadd.s32 %s41, 1
      %s43 = scalar_select %p40, %s41, %s42
      %p46 = pneg %p40
      %p47 = scmp.eq.s32.totalorder %s17, 7
      %p48 = por %p46, %p47
      %p49 = scmp.ne.s32.totalorder %s41, %s44
      %p50 = scmp.eq.s32.totalorder %s17, 0
      %p51 = por %p49, %p50
      %p52 = scmp.ne.s32.totalorder %s41, %s44
      %p53 = scmp.eq.s32.totalorder %s22, 7
      %p54 = por %p52, %p53
      %p55 = scmp.ne.s32.totalorder %s44, %s45
      %p56 = scmp.eq.s32.totalorder %s22, 0
      %p57 = por %p55, %p56
      %p58 = scmp.ne.s32.totalorder %s44, %s45
      %p59 = scmp.eq.s32.totalorder %s23, 7
      %p60 = por %p58, %p59
      %p62 = scmp.ne.s32.totalorder %s45, %s61
      %p63 = scmp.eq.s32.totalorder %s23, 0
      %p64 = por %p62, %p63
      %s66 = sadd.s32 %s65, 1
      %p69 = scmp.eq.s32.totalorder %s17, 7
      %p70 = scmp.ne.s32.totalorder %s65, %s67
      %p71 = scmp.eq.s32.totalorder %s17, 0
      %p72 = por %p70, %p71
      %p73 = scmp.ne.s32.totalorder %s65, %s67
      %p74 = scmp.eq.s32.totalorder %s22, 7
      %p75 = por %p73, %p74
      %p76 = scmp.ne.s32.totalorder %s67, %s68
      %p77 = scmp.eq.s32.totalorder %s22, 0
      %p78 = por %p76, %p77
      %p79 = scmp.ne.s32.totalorder %s67, %s68
      %p80 = scmp.eq.s32.totalorder %s23, 7
      %p81 = por %p79, %p80
      %p83 = scmp.ne.s32.totalorder %s68, %s82
      %p84 = scmp.eq.s32.totalorder %s23, 0
      %p85 = por %p83, %p84
      %s87 = sadd.s32 %s86, 1
      %p90 = scmp.eq.s32.totalorder %s17, 7
      %p91 = scmp.ne.s32.totalorder %s86, %s88
      %p92 = scmp.eq.s32.totalorder %s17, 0
      %p93 = por %p91, %p92
      %p94 = scmp.ne.s32.totalorder %s86, %s88
      %p95 = scmp.eq.s32.totalorder %s22, 7
      %p96 = por %p94, %p95
      %p97 = scmp.ne.s32.totalorder %s88, %s89
      %p98 = scmp.eq.s32.totalorder %s22, 0
      %p99 = por %p97, %p98
      %p100 = scmp.ne.s32.totalorder %s88, %s89
      %p101 = scmp.eq.s32.totalorder %s23, 7
      %p102 = por %p100, %p101
      %p104 = scmp.ne.s32.totalorder %s89, %s103
      %p105 = scmp.eq.s32.totalorder %s23, 0
      %p106 = por %p104, %p105
      %s108 = sadd.s32 %s107, 1
      %p111 = scmp.eq.s32.totalorder %s17, 7
      %p112 = scmp.ne.s32.totalorder %s107, %s109
      %p113 = scmp.eq.s32.totalorder %s17, 0
      %p114 = por %p112, %p113
      %p115 = scmp.ne.s32.totalorder %s107, %s109
      %p116 = scmp.eq.s32.totalorder %s22, 7
      %p117 = por %p115, %p116
      %p118 = scmp.ne.s32.totalorder %s109, %s110
      %p119 = scmp.eq.s32.totalorder %s22, 0
      %p120 = por %p118, %p119
      %p121 = scmp.ne.s32.totalorder %s109, %s110
      %p122 = scmp.eq.s32.totalorder %s23, 7
      %p123 = por %p121, %p122
      %p125 = scmp.ne.s32.totalorder %s110, %s124
      %p126 = scmp.eq.s32.totalorder %s23, 0
      %p127 = por %p125, %p126
      %s128 = ssub.s32 %s24, %s36
      %p129 = scmp.eq.s32.totalorder %s128, 0
      %s131 = sadd.s32 %s130, 1
      %s132 = scalar_select %p129, %s130, %s131
      %p135 = pneg %p129
      %p136 = scmp.eq.s32.totalorder %s17, 7
      %p137 = por %p135, %p136
      %p138 = scmp.ne.s32.totalorder %s130, %s133
      %p139 = scmp.eq.s32.totalorder %s17, 0
      %p140 = por %p138, %p139
      %p141 = scmp.ne.s32.totalorder %s130, %s133
      %p142 = scmp.eq.s32.totalorder %s22, 7
      %p143 = por %p141, %p142
      %p144 = scmp.ne.s32.totalorder %s133, %s134
      %p145 = scmp.eq.s32.totalorder %s22, 0
      %p146 = por %p144, %p145
      %p147 = scmp.ne.s32.totalorder %s133, %s134
      %p148 = scmp.eq.s32.totalorder %s23, 7
      %p149 = por %p147, %p148
      %p151 = scmp.ne.s32.totalorder %s134, %s150
      %p152 = scmp.eq.s32.totalorder %s23, 0
      %p153 = por %p151, %p152
      %p154 = scmp.le.s32.totalorder 1, %s17
      %p155 = scmp.lt.s32.totalorder %s17, 9
      %p156 = pnand %p154, %p155
      %p157 = pneg %p156
      // Predicated region
      $region9: #{tpu_custom_call.1} parent=5 // pred_check
        _
      $region10: #{tpu_custom_call.1} parent=5 // pred_check_branch
        %159 = sbr.rel (%p156) target = $region12
      $region11: #{tpu_custom_call.1} parent=5 // pred_region
        %s160 = ssub.s32 %s17, 1
        // Predicated region
        $region13: #{tpu_custom_call.1} parent=11 // pred_check
          %p161 = pneg %p78
        $region14: #{tpu_custom_call.1} parent=11 // pred_check_branch
          %163 = sbr.rel (%p161) target = $region16
        $region15: #{tpu_custom_call.1} parent=11 // pred_region
          %s165 = ssub.s32 6144, 6144
          %166 = vsyncadd [#allocation10], %s165
          %s167 = sshll.u32 [#allocation9], 4
          %s168 = int_to_ptr.vmem [resolvable:$true] %s167
          %173 = dma.hbm_to_vmem [thread:$0]  %s1, 6144, %s168, [#allocation10], 128, 128, 8
        $region16: #{tpu_custom_call.1} parent=11 // pred_fallthru
          _
        // Predicated region
        $region17: #{tpu_custom_call.1} parent=11 // pred_check
          %p174 = pneg %p99
        $region18: #{tpu_custom_call.1} parent=11 // pred_check_branch
          %176 = sbr.rel (%p174) target = $region20
        $region19: #{tpu_custom_call.1} parent=11 // pred_region
          _
        $region20: #{tpu_custom_call.1} parent=11 // pred_fallthru
          _
        // Predicated region
        $region21: #{tpu_custom_call.1} parent=11 // pred_check
          %p177 = pneg %p120
        $region22: #{tpu_custom_call.1} parent=11 // pred_check_branch
          %179 = sbr.rel (%p177) target = $region24
        $region23: #{tpu_custom_call.1} parent=11 // pred_region
          _
        $region24: #{tpu_custom_call.1} parent=11 // pred_fallthru
          _
      $region12: #{tpu_custom_call.1} parent=5 // pred_fallthru
        _
      %p180 = scmp.lt.s32.totalorder %s17, 8
      // Predicated region
      $region25: #{tpu_custom_call.1} parent=5 // pred_check
        %p181 = pneg %p180
      $region26: #{tpu_custom_call.1} parent=5 // pred_check_branch
        %183 = sbr.rel (%p181) target = $region28
      $region27: #{tpu_custom_call.1} parent=5 // pred_region
        // Predicated region
        $region29: #{tpu_custom_call.1} parent=27 // pred_check
          %p184 = pneg %p51
        $region30: #{tpu_custom_call.1} parent=27 // pred_check_branch
          %186 = sbr.rel (%p184) target = $region32
        $region31: #{tpu_custom_call.1} parent=27 // pred_region
          %s187 = sand.u32 %s41, 1
          %s188 = scalar_lea.sflag [#allocation7], %s187
          %s189 = sand.u32 %s41, 1
          %s190 = smul.addr %s189, 64
          %s191 = scalar_lea.vmem [#allocation6], %s190
          %s192 = smul.u32 8, %s25
          %s193 = ssub.s32 25, %s192
          %p194 = scmp.lt.s32.totalorder %s193, 8
          %s195 = scalar_select %p194, %s193, 8
          %s196 = smul.u32 128, %s195
          %s198 = ssub.s32 1024, %s196
          %199 = vsyncadd %s188, %s198
          %p200 = scmp.ne.s32.totalorder 0, %s196
          %s201 = smul.addr %s24, 25
          %s202 = sadd.s32 %s192, %s201
          %s203 = smul.addr %s202, 128
          %s204 = scalar_lea.hbm %s0, %s203
          %s205 = smul.u32 8, %s195
          %s206 = sshll.u32 %s191, 4
          %s207 = int_to_ptr.vmem [resolvable:$true] %s206
          %s208 = sshll.u32 %s205, 4
          %212 = dma.hbm_to_vmem [thread:$0]  (%p200), %s204, %s208, %s207, %s188, 128, 128, 8
        $region32: #{tpu_custom_call.1} parent=27 // pred_fallthru
          _
      $region28: #{tpu_custom_call.1} parent=5 // pred_fallthru
        _
      %p213 = scmp.le.s32.totalorder 1, %s17
      %p214 = scmp.lt.s32.totalorder %s17, 9
      %p215 = pnand %p213, %p214
      %p216 = pneg %p215
      // Predicated region
      $region33: #{tpu_custom_call.1} parent=5 // pred_check
        _
      $region34: #{tpu_custom_call.1} parent=5 // pred_check_branch
        %218 = sbr.rel (%p215) target = $region36
      $region35: #{tpu_custom_call.1} parent=5 // pred_region
        %s219 = ssub.s32 %s17, 1
        %s220 = sand.u32 %s44, 1
        %s221 = scalar_lea.sflag [#allocation7], %s220
        %s222 = sand.u32 %s44, 1
        %s223 = smul.addr %s222, 64
        %s224 = scalar_lea.vmem [#allocation6], %s223
        // Predicated region
        $region37: #{tpu_custom_call.1} parent=35 // pred_check
          %p225 = pneg %p57
        $region38: #{tpu_custom_call.1} parent=35 // pred_check_branch
          %227 = sbr.rel (%p225) target = $region40
        $region39: #{tpu_custom_call.1} parent=35 // pred_region
          %228 = dma.done %s221, 1024
        $region40: #{tpu_custom_call.1} parent=35 // pred_fallthru
          _
        // Predicated region
        $region41: #{tpu_custom_call.1} parent=35 // pred_check
          %p229 = pneg %p78
        $region42: #{tpu_custom_call.1} parent=35 // pred_check_branch
          %231 = sbr.rel (%p229) target = $region44
        $region43: #{tpu_custom_call.1} parent=35 // pred_region
          %232 = dma.done [#allocation10], 6144
        $region44: #{tpu_custom_call.1} parent=35 // pred_fallthru
          _
        %s233 = sand.u32 %s44, 1
        %s234 = scalar_lea.sflag [#allocation7], %s233
        %s235 = sand.u32 %s44, 1
        %s236 = smul.addr %s235, 64
        %s237 = scalar_lea.vmem [#allocation6], %s236
        %p238 = pneg %p57
        %p239 = pneg %p54
        %p240 = pneg %p78
        %p241 = pneg %p75
        %p242 = pneg %p99
        %p243 = pneg %p96
        %p244 = pneg %p120
        %p245 = pneg %p117
        %p246 = pneg %p146
        %p247 = pneg %p143
        %s248 = sand.u32 %s133, 1
        %s249 = scalar_lea.sflag [#allocation8], %s248
        %s250 = sand.u32 %s133, 1
        %s251 = scalar_lea.vmem [#allocation11], %s250
        %s252 = smul.u32 8, %s27
        %s253 = ssub.s32 25, %s252
        %p254 = scmp.lt.s32.totalorder %s253, 8
        %s255 = scalar_select %p254, %s253, 8
        %s256 = smul.u32 128, %s255
        %p257 = scmp.eq.s32.totalorder %s27, 0
        // Predicated region
        $region45: #{tpu_custom_call.1} parent=35 // pred_check
          %p258 = pneg %p257
        $region46: #{tpu_custom_call.1} parent=35 // pred_check_branch
          %260 = sbr.rel (%p258) target = $region48
        $region47: #{tpu_custom_call.1} parent=35 // pred_region
          %261 = vst [vmem:[#allocation2] sm:$0x3] 0.0
          %vm262 = vcmask 0
          %263 = vst.msk [vmem:[#allocation3] sm:$0x1] %vm262, -inf
          %264 = vst.msk [vmem:[#allocation4] sm:$0x1] %vm262, 0.0
          %265 = vst [vmem:[#allocation5] sm:$0x1] 0.0
        $region48: #{tpu_custom_call.1} parent=35 // pred_fallthru
          _
        %v266 = vlaneseq
        %v267 = vshrl.u32 %v266, 7
        %v268 = vadd.s32 %v267, 8
        %v269 = vadd.s32 %v267, 16
        %v270 = vadd.s32 %v267, 24
        %v271 = vadd.s32 %v267, 32
        %v272 = vadd.s32 %v267, 40
        %v273 = vadd.s32 %v267, 48
        %v274 = vadd.s32 %v267, 56
        %v275 = vld [vmem:[%s224] sm:$0xff]
        %v276 = vld [vmem:[%s224 + $0x8] sm:$0xff]
        %v277 = vld [vmem:[%s224 + $0x10] sm:$0xff]
        %v278 = vld [vmem:[%s224 + $0x18] sm:$0xff]
        %v279 = vld [vmem:[%s224 + $0x20] sm:$0xff]
        %v280 = vld [vmem:[%s224 + $0x28] sm:$0xff]
        %v281 = vld [vmem:[%s224 + $0x30] sm:$0xff]
        %v282 = vld [vmem:[%s224 + $0x38] sm:$0xff]
        %vm283 = vcmp.lt.s32.totalorder %v267, 8
        %vm284 = vcmp.lt.s32.totalorder %v268, 8
        %vm285 = vcmp.lt.s32.totalorder %v269, 8
        %vm286 = vcmp.lt.s32.totalorder %v270, 8
        %vm287 = vcmp.lt.s32.totalorder %v271, 8
        %vm288 = vcmp.lt.s32.totalorder %v272, 8
        %vm289 = vcmp.lt.s32.totalorder %v273, 8
        %vm290 = vcmp.lt.s32.totalorder %v274, 8
        %p291 = scmp.ne.s32.totalorder %s27, 3
        %s292 = scalar_select %p291, 1, 0
        %v293 = vstv %s292
        %vm294 = vcmp.eq.s32.totalorder %v293, 1
        %vm295 = vmor %vm283, %vm294
        %vm296 = vmor %vm284, %vm294
        %vm297 = vmor %vm285, %vm294
        %vm298 = vmor %vm286, %vm294
        %vm299 = vmor %vm287, %vm294
        %vm300 = vmor %vm288, %vm294
        %vm301 = vmor %vm289, %vm294
        %vm302 = vmor %vm290, %vm294
        %v303 = vsel %vm295, 1, 0
        %v304 = vsel %vm296, 1, 0
        %v305 = vsel %vm297, 1, 0
        %v306 = vsel %vm298, 1, 0
        %v307 = vsel %vm299, 1, 0
        %v308 = vsel %vm300, 1, 0
        %v309 = vsel %vm301, 1, 0
        %v310 = vsel %vm302, 1, 0
        %vm311 = vcmp.eq.s32.totalorder %v303, 1
        %vm312 = vcmp.eq.s32.totalorder %v304, 1
        %vm313 = vcmp.eq.s32.totalorder %v305, 1
        %vm314 = vcmp.eq.s32.totalorder %v306, 1
        %vm315 = vcmp.eq.s32.totalorder %v307, 1
        %vm316 = vcmp.eq.s32.totalorder %v308, 1
        %vm317 = vcmp.eq.s32.totalorder %v309, 1
        %vm318 = vcmp.eq.s32.totalorder %v310, 1
        %v319 = vsel %vm311, %v275, 0.0
        %v320 = vsel %vm312, %v276, 0.0
        %v321 = vsel %vm313, %v277, 0.0
        %v322 = vsel %vm314, %v278, 0.0
        %v323 = vsel %vm315, %v279, 0.0
        %v324 = vsel %vm316, %v280, 0.0
        %v325 = vsel %vm317, %v281, 0.0
        %v326 = vsel %vm318, %v282, 0.0
        %v327 = vld [vmem:[#allocation2] sm:$0x3]
        %v329 = vrot.slane %v327, 1
        %vm339 = vcmask 1040384
        %v340 = vrot.slane %v319, 7
        %v341 = vrot.slane %v320, 7
        %v342 = vsel %vm339, %v340, %v341
        %v343 = vrot.slane %v321, 7
        %v344 = vsel %vm339, %v341, %v343
        %v345 = vrot.slane %v322, 7
        %v346 = vsel %vm339, %v343, %v345
        %v347 = vrot.slane %v323, 7
        %v348 = vsel %vm339, %v345, %v347
        %v349 = vrot.slane %v324, 7
        %v350 = vsel %vm339, %v347, %v349
        %v351 = vrot.slane %v325, 7
        %v352 = vsel %vm339, %v349, %v351
        %v353 = vrot.slane %v326, 7
        %v354 = vsel %vm339, %v351, %v353
        %v363 = vsel %vm339, %v329, %v340
        %vm364 = vcmask 1041408
        %v365 = vrot.slane %v319, 6
        %v366 = vrot.slane %v320, 6
        %v367 = vsel %vm364, %v365, %v366
        %v368 = vrot.slane %v321, 6
        %v369 = vsel %vm364, %v366, %v368
        %v370 = vrot.slane %v322, 6
        %v371 = vsel %vm364, %v368, %v370
        %v372 = vrot.slane %v323, 6
        %v373 = vsel %vm364, %v370, %v372
        %v374 = vrot.slane %v324, 6
        %v375 = vsel %vm364, %v372, %v374
        %v376 = vrot.slane %v325, 6
        %v377 = vsel %vm364, %v374, %v376
        %v378 = vrot.slane %v326, 6
        %v379 = vsel %vm364, %v376, %v378
        %v388 = vsel %vm364, %v327, %v365
        %v389 = vld [vmem:[#allocation9] sm:$0xff]
        %v390 = vld [vmem:[#allocation9 + $0x8] sm:$0xff]
        %v391 = vld [vmem:[#allocation9 + $0x10] sm:$0xff]
        %v392 = vld [vmem:[#allocation9 + $0x18] sm:$0xff]
        %v393 = vld [vmem:[#allocation9 + $0x20] sm:$0xff]
        %v394 = vld [vmem:[#allocation9 + $0x28] sm:$0xff]
        %v395 = vld [vmem:[#allocation9 + $0x30] sm:$0xff]
        %v396 = vld [vmem:[#allocation9 + $0x38] sm:$0xff]
        %v397 = vld [vmem:[#allocation9 + $0x40] sm:$0xff]
        %v398 = vld [vmem:[#allocation9 + $0x48] sm:$0xff]
        %v399 = vld [vmem:[#allocation9 + $0x50] sm:$0xff]
        %v400 = vld [vmem:[#allocation9 + $0x58] sm:$0xff]
        %v401 = vld [vmem:[#allocation9 + $0x60] sm:$0xff]
        %v402 = vld [vmem:[#allocation9 + $0x68] sm:$0xff]
        %v403 = vld [vmem:[#allocation9 + $0x70] sm:$0xff]
        %v404 = vld [vmem:[#allocation9 + $0x78] sm:$0xff]
        %s405 = scalar_lea.vmem [#allocation9], 128
        %v406 = vld [vmem:[%s405] sm:$0xff]
        %v407 = vld [vmem:[%s405 + $0x8] sm:$0xff]
        %v408 = vld [vmem:[%s405 + $0x10] sm:$0xff]
        %v409 = vld [vmem:[%s405 + $0x18] sm:$0xff]
        %v410 = vld [vmem:[%s405 + $0x20] sm:$0xff]
        %v411 = vld [vmem:[%s405 + $0x28] sm:$0xff]
        %v412 = vld [vmem:[%s405 + $0x30] sm:$0xff]
        %v413 = vld [vmem:[%s405 + $0x38] sm:$0xff]
        %v414 = vld [vmem:[%s405 + $0x40] sm:$0xff]
        %v415 = vld [vmem:[%s405 + $0x48] sm:$0xff]
        %v416 = vld [vmem:[%s405 + $0x50] sm:$0xff]
        %v417 = vld [vmem:[%s405 + $0x58] sm:$0xff]
        %v418 = vld [vmem:[%s405 + $0x60] sm:$0xff]
        %v419 = vld [vmem:[%s405 + $0x68] sm:$0xff]
        %v420 = vld [vmem:[%s405 + $0x70] sm:$0xff]
        %v421 = vld [vmem:[%s405 + $0x78] sm:$0xff]
        %s422 = scalar_lea.vmem [#allocation9], 256
        %v423 = vld [vmem:[%s422] sm:$0xff]
        %v424 = vld [vmem:[%s422 + $0x8] sm:$0xff]
        %v425 = vld [vmem:[%s422 + $0x10] sm:$0xff]
        %v426 = vld [vmem:[%s422 + $0x18] sm:$0xff]
        %v427 = vld [vmem:[%s422 + $0x20] sm:$0xff]
        %v428 = vld [vmem:[%s422 + $0x28] sm:$0xff]
        %v429 = vld [vmem:[%s422 + $0x30] sm:$0xff]
        %v430 = vld [vmem:[%s422 + $0x38] sm:$0xff]
        %v431 = vld [vmem:[%s422 + $0x40] sm:$0xff]
        %v432 = vld [vmem:[%s422 + $0x48] sm:$0xff]
        %v433 = vld [vmem:[%s422 + $0x50] sm:$0xff]
        %v434 = vld [vmem:[%s422 + $0x58] sm:$0xff]
        %v435 = vld [vmem:[%s422 + $0x60] sm:$0xff]
        %v436 = vld [vmem:[%s422 + $0x68] sm:$0xff]
        %v437 = vld [vmem:[%s422 + $0x70] sm:$0xff]
        %v438 = vld [vmem:[%s422 + $0x78] sm:$0xff]
        %439 = vmatprep.subr.mxu0 0.0
        %440 = vmatpush1.msra.mxu0 %v406
        %441 = vmatprep.subr.mxu0 0.0
        %442 = vmatpush1.msra.mxu0 %v407
        %443 = vmatprep.subr.mxu0 0.0
        %444 = vmatpush1.msra.mxu0 %v408
        %445 = vmatprep.subr.mxu0 0.0
        %446 = vmatpush1.msra.mxu0 %v409
        %447 = vmatprep.subr.mxu0 0.0
        %448 = vmatpush1.msra.mxu0 %v410
        %449 = vmatprep.subr.mxu0 0.0
        %450 = vmatpush1.msra.mxu0 %v411
        %451 = vmatprep.subr.mxu0 0.0
        %452 = vmatpush1.msra.mxu0 %v412
        %453 = vmatprep.subr.mxu0 0.0
        %454 = vmatpush1.msra.mxu0 %v413
        %455 = vmatprep.subr.mxu0 0.0
        %456 = vmatpush1.msra.mxu0 %v414
        %457 = vmatprep.subr.mxu0 0.0
        %458 = vmatpush1.msra.mxu0 %v415
        %459 = vmatprep.subr.mxu0 0.0
        %460 = vmatpush1.msra.mxu0 %v416
        %461 = vmatprep.subr.mxu0 0.0
        %462 = vmatpush1.msra.mxu0 %v417
        %463 = vmatprep.subr.mxu0 0.0
        %464 = vmatpush1.msra.mxu0 %v418
        %465 = vmatprep.subr.mxu0 0.0
        %466 = vmatpush1.msra.mxu0 %v419
        %467 = vmatprep.subr.mxu0 0.0
        %468 = vmatpush1.msra.mxu0 %v420
        %469 = vmatprep.subr.mxu0 0.0
        %470 = vmatpush1.msra.mxu0 %v421
        %471 = vmatprep.subr.mxu0 0.0
        %472 = vmatpush1.msra.mxu0 0.0
        %473 = vmatprep.subr.mxu0 0.0
        %474 = vmatpush1.msra.mxu0 0.0
        %475 = vmatprep.subr.mxu0 0.0
        %476 = vmatpush1.msra.mxu0 0.0
        %477 = vmatprep.subr.mxu0 0.0
        %478 = vmatpush1.msra.mxu0 0.0
        %479 = vmatprep.subr.mxu0 0.0
        %480 = vmatpush1.msra.mxu0 0.0
        %481 = vmatprep.subr.mxu0 0.0
        %482 = vmatpush1.msra.mxu0 0.0
        %483 = vmatprep.subr.mxu0 0.0
        %484 = vmatpush1.msra.mxu0 0.0
        %485 = vmatprep.subr.mxu0 0.0
        %486 = vmatpush1.msra.mxu0 0.0
        %487 = vmatprep.subr.mxu0 0.0
        %488 = vmatpush1.msra.mxu0 0.0
        %489 = vmatprep.subr.mxu0 0.0
        %490 = vmatpush1.msra.mxu0 0.0
        %491 = vmatprep.subr.mxu0 0.0
        %492 = vmatpush1.msra.mxu0 0.0
        %493 = vmatprep.subr.mxu0 0.0
        %494 = vmatpush1.msra.mxu0 0.0
        %495 = vmatprep.subr.mxu0 0.0
        %496 = vmatpush1.msra.mxu0 0.0
        %497 = vmatprep.subr.mxu0 0.0
        %498 = vmatpush1.msra.mxu0 0.0
        %499 = vmatprep.subr.mxu0 0.0
        %500 = vmatpush1.msra.mxu0 0.0
        %501 = vmatprep.subr.mxu0 0.0
        %502 = vmatpush1.msra.mxu0 0.0
        %503 = vmatprep.mubr.f32.mxu0 0.0
        %504 = vmatmul.mubr.f32.gmra.mrb[0].mxu0 %v363
        %v505 = vpop.f32.mrb[0].mxu0
        %v506 = vadd.f32 0.0, %v505
        %v507 = vpop.f32.mrb[0].mxu0
        %508 = vmatprep.mubr.f32.mxu0 0.0
        %509 = vmatmul.mubr.f32.gmra.mrb[0].mxu0 %v342
        %v510 = vpop.f32.mrb[0].mxu0
        %v511 = vadd.f32 0.0, %v510
        %v512 = vpop.f32.mrb[0].mxu0
        %513 = vmatprep.mubr.f32.mxu0 0.0
        %514 = vmatmul.mubr.f32.gmra.mrb[0].mxu0 %v344
        %v515 = vpop.f32.mrb[0].mxu0
        %v516 = vadd.f32 0.0, %v515
        %v517 = vpop.f32.mrb[0].mxu0
        %518 = vmatprep.mubr.f32.mxu0 0.0
        %519 = vmatmul.mubr.f32.gmra.mrb[0].mxu0 %v346
        %v520 = vpop.f32.mrb[0].mxu0
        %v521 = vadd.f32 0.0, %v520
        %v522 = vpop.f32.mrb[0].mxu0
        %523 = vmatprep.mubr.f32.mxu0 0.0
        %524 = vmatmul.mubr.f32.gmra.mrb[0].mxu0 %v348
        %v525 = vpop.f32.mrb[0].mxu0
        %v526 = vadd.f32 0.0, %v525
        %v527 = vpop.f32.mrb[0].mxu0
        %528 = vmatprep.mubr.f32.mxu0 0.0
        %529 = vmatmul.mubr.f32.gmra.mrb[0].mxu0 %v350
        %v530 = vpop.f32.mrb[0].mxu0
        %v531 = vadd.f32 0.0, %v530
        %v532 = vpop.f32.mrb[0].mxu0
        %533 = vmatprep.mubr.f32.mxu0 0.0
        %534 = vmatmul.mubr.f32.gmra.mrb[0].mxu0 %v352
        %v535 = vpop.f32.mrb[0].mxu0
        %v536 = vadd.f32 0.0, %v535
        %v537 = vpop.f32.mrb[0].mxu0
        %538 = vmatprep.mubr.f32.mxu0 0.0
        %539 = vmatmul.mubr.f32.gmra.mrb[0].mxu0 %v354
        %v540 = vpop.f32.mrb[0].mxu0
        %v541 = vadd.f32 0.0, %v540
        %v542 = vpop.f32.mrb[0].mxu0
        %543 = vdwg.mxu0
        %544 = vmatprep.subr.mxu0 0.0
        %545 = vmatpush1.msra.mxu0 %v389
        %546 = vmatprep.subr.mxu0 0.0
        %547 = vmatpush1.msra.mxu0 %v390
        %548 = vmatprep.subr.mxu0 0.0
        %549 = vmatpush1.msra.mxu0 %v391
        %550 = vmatprep.subr.mxu0 0.0
        %551 = vmatpush1.msra.mxu0 %v392
        %552 = vmatprep.subr.mxu0 0.0
        %553 = vmatpush1.msra.mxu0 %v393
        %554 = vmatprep.subr.mxu0 0.0
        %555 = vmatpush1.msra.mxu0 %v394
        %556 = vmatprep.subr.mxu0 0.0
        %557 = vmatpush1.msra.mxu0 %v395
        %558 = vmatprep.subr.mxu0 0.0
        %559 = vmatpush1.msra.mxu0 %v396
        %560 = vmatprep.subr.mxu0 0.0
        %561 = vmatpush1.msra.mxu0 %v397
        %562 = vmatprep.subr.mxu0 0.0
        %563 = vmatpush1.msra.mxu0 %v398
        %564 = vmatprep.subr.mxu0 0.0
        %565 = vmatpush1.msra.mxu0 %v399
        %566 = vmatprep.subr.mxu0 0.0
        %567 = vmatpush1.msra.mxu0 %v400
        %568 = vmatprep.subr.mxu0 0.0
        %569 = vmatpush1.msra.mxu0 %v401
        %570 = vmatprep.subr.mxu0 0.0
        %571 = vmatpush1.msra.mxu0 %v402
        %572 = vmatprep.subr.mxu0 0.0
        %573 = vmatpush1.msra.mxu0 %v403
        %574 = vmatprep.subr.mxu0 0.0
        %575 = vmatpush1.msra.mxu0 %v404
        %576 = vmatprep.subr.mxu0 0.0
        %577 = vmatpush1.msra.mxu0 0.0
        %578 = vmatprep.subr.mxu0 0.0
        %579 = vmatpush1.msra.mxu0 0.0
        %580 = vmatprep.subr.mxu0 0.0
        %581 = vmatpush1.msra.mxu0 0.0
        %582 = vmatprep.subr.mxu0 0.0
        %583 = vmatpush1.msra.mxu0 0.0
        %584 = vmatprep.subr.mxu0 0.0
        %585 = vmatpush1.msra.mxu0 0.0
        %586 = vmatprep.subr.mxu0 0.0
        %587 = vmatpush1.msra.mxu0 0.0
        %588 = vmatprep.subr.mxu0 0.0
        %589 = vmatpush1.msra.mxu0 0.0
        %590 = vmatprep.subr.mxu0 0.0
        %591 = vmatpush1.msra.mxu0 0.0
        %592 = vmatprep.subr.mxu0 0.0
        %593 = vmatpush1.msra.mxu0 0.0
        %594 = vmatprep.subr.mxu0 0.0
        %595 = vmatpush1.msra.mxu0 0.0
        %596 = vmatprep.subr.mxu0 0.0
        %597 = vmatpush1.msra.mxu0 0.0
        %598 = vmatprep.subr.mxu0 0.0
        %599 = vmatpush1.msra.mxu0 0.0
        %600 = vmatprep.subr.mxu0 0.0
        %601 = vmatpush1.msra.mxu0 0.0
        %602 = vmatprep.subr.mxu0 0.0
        %603 = vmatpush1.msra.mxu0 0.0
        %604 = vmatprep.subr.mxu0 0.0
        %605 = vmatpush1.msra.mxu0 0.0
        %606 = vmatprep.subr.mxu0 0.0
        %607 = vmatpush1.msra.mxu0 0.0
        %608 = vmatprep.mubr.f32.mxu0 0.0
        %609 = vmatmul.mubr.f32.gmra.mrb[0].mxu0 %v388
        %v610 = vpop.f32.mrb[0].mxu0
        %v611 = vadd.f32 %v506, %v610
        %v612 = vpop.f32.mrb[0].mxu0
        %613 = vmatprep.mubr.f32.mxu0 0.0
        %614 = vmatmul.mubr.f32.gmra.mrb[0].mxu0 %v367
        %v615 = vpop.f32.mrb[0].mxu0
        %v616 = vadd.f32 %v511, %v615
        %v617 = vpop.f32.mrb[0].mxu0
        %618 = vmatprep.mubr.f32.mxu0 0.0
        %619 = vmatmul.mubr.f32.gmra.mrb[0].mxu0 %v369
        %v620 = vpop.f32.mrb[0].mxu0
        %v621 = vadd.f32 %v516, %v620
        %v622 = vpop.f32.mrb[0].mxu0
        %623 = vmatprep.mubr.f32.mxu0 0.0
        %624 = vmatmul.mubr.f32.gmra.mrb[0].mxu0 %v371
        %v625 = vpop.f32.mrb[0].mxu0
        %v626 = vadd.f32 %v521, %v625
        %v627 = vpop.f32.mrb[0].mxu0
        %628 = vmatprep.mubr.f32.mxu0 0.0
        %629 = vmatmul.mubr.f32.gmra.mrb[0].mxu0 %v373
        %v630 = vpop.f32.mrb[0].mxu0
        %v631 = vadd.f32 %v526, %v630
        %v632 = vpop.f32.mrb[0].mxu0
        %633 = vmatprep.mubr.f32.mxu0 0.0
        %634 = vmatmul.mubr.f32.gmra.mrb[0].mxu0 %v375
        %v635 = vpop.f32.mrb[0].mxu0
        %v636 = vadd.f32 %v531, %v635
        %v637 = vpop.f32.mrb[0].mxu0
        %638 = vmatprep.mubr.f32.mxu0 0.0
        %639 = vmatmul.mubr.f32.gmra.mrb[0].mxu0 %v377
        %v640 = vpop.f32.mrb[0].mxu0
        %v641 = vadd.f32 %v536, %v640
        %v642 = vpop.f32.mrb[0].mxu0
        %643 = vmatprep.mubr.f32.mxu0 0.0
        %644 = vmatmul.mubr.f32.gmra.mrb[0].mxu0 %v379
        %v645 = vpop.f32.mrb[0].mxu0
        %v646 = vadd.f32 %v541, %v645
        %v647 = vpop.f32.mrb[0].mxu0
        %648 = vdwg.mxu0
        %649 = vmatprep.subr.mxu0 0.0
        %650 = vmatpush1.msra.mxu0 %v423
        %651 = vmatprep.subr.mxu0 0.0
        %652 = vmatpush1.msra.mxu0 %v424
        %653 = vmatprep.subr.mxu0 0.0
        %654 = vmatpush1.msra.mxu0 %v425
        %655 = vmatprep.subr.mxu0 0.0
        %656 = vmatpush1.msra.mxu0 %v426
        %657 = vmatprep.subr.mxu0 0.0
        %658 = vmatpush1.msra.mxu0 %v427
        %659 = vmatprep.subr.mxu0 0.0
        %660 = vmatpush1.msra.mxu0 %v428
        %661 = vmatprep.subr.mxu0 0.0
        %662 = vmatpush1.msra.mxu0 %v429
        %663 = vmatprep.subr.mxu0 0.0
        %664 = vmatpush1.msra.mxu0 %v430
        %665 = vmatprep.subr.mxu0 0.0
        %666 = vmatpush1.msra.mxu0 %v431
        %667 = vmatprep.subr.mxu0 0.0
        %668 = vmatpush1.msra.mxu0 %v432
        %669 = vmatprep.subr.mxu0 0.0
        %670 = vmatpush1.msra.mxu0 %v433
        %671 = vmatprep.subr.mxu0 0.0
        %672 = vmatpush1.msra.mxu0 %v434
        %673 = vmatprep.subr.mxu0 0.0
        %674 = vmatpush1.msra.mxu0 %v435
        %675 = vmatprep.subr.mxu0 0.0
        %676 = vmatpush1.msra.mxu0 %v436
        %677 = vmatprep.subr.mxu0 0.0
        %678 = vmatpush1.msra.mxu0 %v437
        %679 = vmatprep.subr.mxu0 0.0
        %680 = vmatpush1.msra.mxu0 %v438
        %681 = vmatprep.subr.mxu0 0.0
        %682 = vmatpush1.msra.mxu0 0.0
        %683 = vmatprep.subr.mxu0 0.0
        %684 = vmatpush1.msra.mxu0 0.0
        %685 = vmatprep.subr.mxu0 0.0
        %686 = vmatpush1.msra.mxu0 0.0
        %687 = vmatprep.subr.mxu0 0.0
        %688 = vmatpush1.msra.mxu0 0.0
        %689 = vmatprep.subr.mxu0 0.0
        %690 = vmatpush1.msra.mxu0 0.0
        %691 = vmatprep.subr.mxu0 0.0
        %692 = vmatpush1.msra.mxu0 0.0
        %693 = vmatprep.subr.mxu0 0.0
        %694 = vmatpush1.msra.mxu0 0.0
        %695 = vmatprep.subr.mxu0 0.0
        %696 = vmatpush1.msra.mxu0 0.0
        %697 = vmatprep.subr.mxu0 0.0
        %698 = vmatpush1.msra.mxu0 0.0
        %699 = vmatprep.subr.mxu0 0.0
        %700 = vmatpush1.msra.mxu0 0.0
        %701 = vmatprep.subr.mxu0 0.0
        %702 = vmatpush1.msra.mxu0 0.0
        %703 = vmatprep.subr.mxu0 0.0
        %704 = vmatpush1.msra.mxu0 0.0
        %705 = vmatprep.subr.mxu0 0.0
        %706 = vmatpush1.msra.mxu0 0.0
        %707 = vmatprep.subr.mxu0 0.0
        %708 = vmatpush1.msra.mxu0 0.0
        %709 = vmatprep.subr.mxu0 0.0
        %710 = vmatpush1.msra.mxu0 0.0
        %711 = vmatprep.subr.mxu0 0.0
        %712 = vmatpush1.msra.mxu0 0.0
        %713 = vmatprep.mubr.f32.mxu0 0.0
        %714 = vmatmul.mubr.f32.gmra.mrb[0].mxu0 %v319
        %v715 = vpop.f32.mrb[0].mxu0
        %v716 = vadd.f32 0.0, %v715
        %v717 = vpop.f32.mrb[0].mxu0
        %718 = vmatprep.mubr.f32.mxu0 0.0
        %719 = vmatmul.mubr.f32.gmra.mrb[0].mxu0 %v320
        %v720 = vpop.f32.mrb[0].mxu0
        %v721 = vadd.f32 0.0, %v720
        %v722 = vpop.f32.mrb[0].mxu0
        %723 = vmatprep.mubr.f32.mxu0 0.0
        %724 = vmatmul.mubr.f32.gmra.mrb[0].mxu0 %v321
        %v725 = vpop.f32.mrb[0].mxu0
        %v726 = vadd.f32 0.0, %v725
        %v727 = vpop.f32.mrb[0].mxu0
        %728 = vmatprep.mubr.f32.mxu0 0.0
        %729 = vmatmul.mubr.f32.gmra.mrb[0].mxu0 %v322
        %v730 = vpop.f32.mrb[0].mxu0
        %v731 = vadd.f32 0.0, %v730
        %v732 = vpop.f32.mrb[0].mxu0
        %733 = vmatprep.mubr.f32.mxu0 0.0
        %734 = vmatmul.mubr.f32.gmra.mrb[0].mxu0 %v323
        %v735 = vpop.f32.mrb[0].mxu0
        %v736 = vadd.f32 0.0, %v735
        %v737 = vpop.f32.mrb[0].mxu0
        %738 = vmatprep.mubr.f32.mxu0 0.0
        %739 = vmatmul.mubr.f32.gmra.mrb[0].mxu0 %v324
        %v740 = vpop.f32.mrb[0].mxu0
        %v741 = vadd.f32 0.0, %v740
        %v742 = vpop.f32.mrb[0].mxu0
        %743 = vmatprep.mubr.f32.mxu0 0.0
        %744 = vmatmul.mubr.f32.gmra.mrb[0].mxu0 %v325
        %v745 = vpop.f32.mrb[0].mxu0
        %v746 = vadd.f32 0.0, %v745
        %v747 = vpop.f32.mrb[0].mxu0
        %748 = vmatprep.mubr.f32.mxu0 0.0
        %749 = vmatmul.mubr.f32.gmra.mrb[0].mxu0 %v326
        %v750 = vpop.f32.mrb[0].mxu0
        %v751 = vadd.f32 0.0, %v750
        %v752 = vpop.f32.mrb[0].mxu0
        %753 = vdwg.mxu0
        %v754 = vadd.f32 %v611, %v716
        %v755 = vadd.f32 %v616, %v721
        %v756 = vadd.f32 %v621, %v726
        %v757 = vadd.f32 %v626, %v731
        %v758 = vadd.f32 %v631, %v736
        %v759 = vadd.f32 %v636, %v741
        %v760 = vadd.f32 %v641, %v746
        %v761 = vadd.f32 %v646, %v751
        %v762 = vld [vmem:[%s2] sm:$0x1]
        %v764 = vlaneseq
        %v765 = vshrl.u32 %v764, 7
        %v766 = vsub.s32 0, %v765
        %v767 = vrot.slane %v762, %v766
        %v769 = vadd.f32 %v754, %v767
        %v770 = vadd.f32 %v755, %v767
        %v771 = vadd.f32 %v756, %v767
        %v772 = vadd.f32 %v757, %v767
        %v773 = vadd.f32 %v758, %v767
        %v774 = vadd.f32 %v759, %v767
        %v775 = vadd.f32 %v760, %v767
        %v776 = vadd.f32 %v761, %v767
        %v777 = vld [vmem:[%s3] sm:$0x1]
        %v779 = vlaneseq
        %v780 = vshrl.u32 %v779, 7
        %v781 = vsub.s32 0, %v780
        %v782 = vrot.slane %v777, %v781
        %v784 = vmul.f32 %v769, %v782
        %v785 = vmul.f32 %v770, %v782
        %v786 = vmul.f32 %v771, %v782
        %v787 = vmul.f32 %v772, %v782
        %v788 = vmul.f32 %v773, %v782
        %v789 = vmul.f32 %v774, %v782
        %v790 = vmul.f32 %v775, %v782
        %v791 = vmul.f32 %v776, %v782
        %792 = vadd.xlane.f32.xlu0 %v784
        %v793 = vpop.xlane.xlu0 %792
        %794 = vadd.xlane.f32.xlu0 %v785
        %v795 = vpop.xlane.xlu0 %794
        %796 = vadd.xlane.f32.xlu0 %v786
        %v797 = vpop.xlane.xlu0 %796
        %798 = vadd.xlane.f32.xlu0 %v787
        %v799 = vpop.xlane.xlu0 %798
        %800 = vadd.xlane.f32.xlu0 %v788
        %v801 = vpop.xlane.xlu0 %800
        %802 = vadd.xlane.f32.xlu0 %v789
        %v803 = vpop.xlane.xlu0 %802
        %804 = vadd.xlane.f32.xlu0 %v790
        %v805 = vpop.xlane.xlu0 %804
        %806 = vadd.xlane.f32.xlu0 %v791
        %v807 = vpop.xlane.xlu0 %806
        %vm808 = vcmp.eq.s32.totalorder %v267, 0
        %vm809 = vcmp.eq.s32.totalorder %v268, 0
        %vm810 = vcmp.eq.s32.totalorder %v269, 0
        %vm811 = vcmp.eq.s32.totalorder %v270, 0
        %vm812 = vcmp.eq.s32.totalorder %v271, 0
        %vm813 = vcmp.eq.s32.totalorder %v272, 0
        %vm814 = vcmp.eq.s32.totalorder %v273, 0
        %vm815 = vcmp.eq.s32.totalorder %v274, 0
        %s816 = scalar_select %p257, 1, 0
        %v817 = vstv %s816
        %vm818 = vcmp.eq.s32.totalorder %v817, 1
        %vm819 = vmand %vm808, %vm818
        %vm820 = vmand %vm809, %vm818
        %vm821 = vmand %vm810, %vm818
        %vm822 = vmand %vm811, %vm818
        %vm823 = vmand %vm812, %vm818
        %vm824 = vmand %vm813, %vm818
        %vm825 = vmand %vm814, %vm818
        %vm826 = vmand %vm815, %vm818
        %vm827 = vcmp.gt.s32.totalorder %v267, 8
        %vm828 = vcmp.gt.s32.totalorder %v268, 8
        %vm829 = vcmp.gt.s32.totalorder %v269, 8
        %vm830 = vcmp.gt.s32.totalorder %v270, 8
        %vm831 = vcmp.gt.s32.totalorder %v271, 8
        %vm832 = vcmp.gt.s32.totalorder %v272, 8
        %vm833 = vcmp.gt.s32.totalorder %v273, 8
        %vm834 = vcmp.gt.s32.totalorder %v274, 8
        %p835 = scmp.eq.s32.totalorder %s27, 3
        %s836 = scalar_select %p835, 1, 0
        %v837 = vstv %s836
        %vm838 = vcmp.eq.s32.totalorder %v837, 1
        %vm839 = vmand %vm827, %vm838
        %vm840 = vmand %vm828, %vm838
        %vm841 = vmand %vm829, %vm838
        %vm842 = vmand %vm830, %vm838
        %vm843 = vmand %vm831, %vm838
        %vm844 = vmand %vm832, %vm838
        %vm845 = vmand %vm833, %vm838
        %vm846 = vmand %vm834, %vm838
        %vm847 = vmor %vm819, %vm839
        %vm848 = vmor %vm820, %vm840
        %vm849 = vmor %vm821, %vm841
        %vm850 = vmor %vm822, %vm842
        %vm851 = vmor %vm823, %vm843
        %vm852 = vmor %vm824, %vm844
        %vm853 = vmor %vm825, %vm845
        %vm854 = vmor %vm826, %vm846
        %v855 = vsel %vm847, -inf, %v793
        %v856 = vsel %vm848, -inf, %v795
        %v857 = vsel %vm849, -inf, %v797
        %v858 = vsel %vm850, -inf, %v799
        %v859 = vsel %vm851, -inf, %v801
        %v860 = vsel %vm852, -inf, %v803
        %v861 = vsel %vm853, -inf, %v805
        %v862 = vsel %vm854, -inf, %v807
        %v863 = vld [vmem:[#allocation3] sm:$0x1]
        %v864 = vmax.f32 %v855, %v859
        %v865 = vmax.f32 %v856, %v860
        %v866 = vmax.f32 %v857, %v861
        %v867 = vmax.f32 %v858, %v862
        %v868 = vmax.f32 %v864, %v865
        %v869 = vmax.f32 %v866, %v867
        %v870 = vmax.f32 %v868, %v869
        %v871 = vrot.slane %v870, 4
        %v872 = vmax.f32 %v870, %v871
        %v873 = vrot.slane %v872, 2
        %v874 = vmax.f32 %v872, %v873
        %v875 = vrot.slane %v874, 1
        %v876 = vmax.f32 %v874, %v875
        %v877 = vmax.f32 %v863, %v876
        %v878 = vsub.f32 %v863, %v877
        %v879 = vmul.f32 %v878, 1.442695
        %v880 = vpow.pop %v879
        %v882 = vlaneseq
        %v883 = vshrl.u32 %v882, 7
        %v884 = vsub.s32 0, %v883
        %v885 = vrot.slane %v877, %v884
        %v887 = vsub.f32 %v855, %v885
        %v888 = vsub.f32 %v856, %v885
        %v889 = vsub.f32 %v857, %v885
        %v890 = vsub.f32 %v858, %v885
        %v891 = vsub.f32 %v859, %v885
        %v892 = vsub.f32 %v860, %v885
        %v893 = vsub.f32 %v861, %v885
        %v894 = vsub.f32 %v862, %v885
        %v895 = vmul.f32 %v887, 1.442695
        %v896 = vpow.pop %v895
        %v897 = vmul.f32 %v888, 1.442695
        %v898 = vpow.pop %v897
        %v899 = vmul.f32 %v889, 1.442695
        %v900 = vpow.pop %v899
        %v901 = vmul.f32 %v890, 1.442695
        %v902 = vpow.pop %v901
        %v903 = vmul.f32 %v891, 1.442695
        %v904 = vpow.pop %v903
        %v905 = vmul.f32 %v892, 1.442695
        %v906 = vpow.pop %v905
        %v907 = vmul.f32 %v893, 1.442695
        %v908 = vpow.pop %v907
        %v909 = vmul.f32 %v894, 1.442695
        %v910 = vpow.pop %v909
        %v911 = vld [vmem:[#allocation4] sm:$0x1]
        %v912 = vmul.f32 %v880, %v911
        %vm913 = vcmask 7168
        %v914 = vsel %vm913, %v896, 0.0
        %v915 = vsel %vm913, %v898, 0.0
        %v916 = vadd.f32 %v914, %v915
        %v917 = vsel %vm913, %v900, 0.0
        %v918 = vadd.f32 %v916, %v917
        %v919 = vsel %vm913, %v902, 0.0
        %v920 = vadd.f32 %v918, %v919
        %v921 = vsel %vm913, %v904, 0.0
        %v922 = vadd.f32 %v920, %v921
        %v923 = vsel %vm913, %v906, 0.0
        %v924 = vadd.f32 %v922, %v923
        %v925 = vsel %vm913, %v908, 0.0
        %v926 = vadd.f32 %v924, %v925
        %v927 = vsel %vm913, %v910, 0.0
        %v928 = vadd.f32 %v926, %v927
        %v929 = vrot.slane %v928, 4
        %v930 = vadd.f32 %v928, %v929
        %v931 = vrot.slane %v930, 2
        %v932 = vadd.f32 %v930, %v931
        %v933 = vrot.slane %v932, 1
        %v934 = vadd.f32 %v932, %v933
        %v935 = vadd.f32 %v912, %v934
        %v936 = vld [vmem:[#allocation5] sm:$0x1]
        %938 = vset.pattern.permute.xlu0 0
        %939 = vperm.xlu0 %938, %v880
        %v940 = vpop.permute.xlu0 %939
        %v942 = vlaneseq
        %v943 = vshrl.u32 %v942, 7
        %v944 = vsub.s32 0, %v943
        %v945 = vrot.slane %v940, %v944
        %v946 = vmul.f32 %v945, %v936
        %948 = vset.pattern.permute.xlu0 0
        %949 = vperm.xlu0 %948, %v896
        %v950 = vpop.permute.xlu0 %949
        %953 = vset.pattern.permute.xlu0 0
        %954 = vperm.xlu0 %953, %v898
        %v955 = vpop.permute.xlu0 %954
        %958 = vset.pattern.permute.xlu0 0
        %959 = vperm.xlu0 %958, %v900
        %v960 = vpop.permute.xlu0 %959
        %963 = vset.pattern.permute.xlu0 0
        %964 = vperm.xlu0 %963, %v902
        %v965 = vpop.permute.xlu0 %964
        %968 = vset.pattern.permute.xlu0 0
        %969 = vperm.xlu0 %968, %v904
        %v970 = vpop.permute.xlu0 %969
        %973 = vset.pattern.permute.xlu0 0
        %974 = vperm.xlu0 %973, %v906
        %v975 = vpop.permute.xlu0 %974
        %978 = vset.pattern.permute.xlu0 0
        %979 = vperm.xlu0 %978, %v908
        %v980 = vpop.permute.xlu0 %979
        %983 = vset.pattern.permute.xlu0 0
        %984 = vperm.xlu0 %983, %v910
        %v985 = vpop.permute.xlu0 %984
        %v987 = vmul.f32 %v950, %v769
        %v988 = vmul.f32 %v955, %v770
        %v989 = vmul.f32 %v960, %v771
        %v990 = vmul.f32 %v965, %v772
        %v991 = vmul.f32 %v970, %v773
        %v992 = vmul.f32 %v975, %v774
        %v993 = vmul.f32 %v980, %v775
        %v994 = vmul.f32 %v985, %v776
        %v995 = vadd.f32 %v987, %v988
        %v996 = vadd.f32 %v995, %v989
        %v997 = vadd.f32 %v996, %v990
        %v998 = vadd.f32 %v997, %v991
        %v999 = vadd.f32 %v998, %v992
        %v1000 = vadd.f32 %v999, %v993
        %v1001 = vadd.f32 %v1000, %v994
        %v1002 = vrot.slane %v1001, 4
        %v1003 = vadd.f32 %v1001, %v1002
        %v1004 = vrot.slane %v1003, 2
        %v1005 = vadd.f32 %v1003, %v1004
        %v1006 = vrot.slane %v1005, 1
        %v1007 = vadd.f32 %v1005, %v1006
        %v1008 = vadd.f32 %v946, %v1007
        %vm1009 = vcmask 0
        %1010 = vst.msk [vmem:[#allocation3] sm:$0x1] %vm1009, %v877
        %1011 = vst.msk [vmem:[#allocation4] sm:$0x1] %vm1009, %v935
        %1012 = vst [vmem:[#allocation5] sm:$0x1] %v1008
        %1013 = vst [vmem:[#allocation2 - $0x6] sm:$0xc0] %v326
        // Predicated region
        $region49: #{tpu_custom_call.1} parent=35 // pred_check
          %p1014 = pneg %p835
        $region50: #{tpu_custom_call.1} parent=35 // pred_check_branch
          %1016 = sbr.rel (%p1014) target = $region52
        $region51: #{tpu_custom_call.1} parent=35 // pred_region
          %1018 = vset.pattern.permute.xlu0 0
          %1019 = vperm.xlu0 %1018, %v935
          %v1020 = vpop.permute.xlu0 %1019
          %v1022 = vlaneseq
          %v1023 = vshrl.u32 %v1022, 7
          %v1024 = vsub.s32 0, %v1023
          %v1025 = vrot.slane %v1020, %v1024
          %v1026 = vrcp.pop %v1025
          %v1027 = vmul.f32 %v1008, %v1026
          %1028 = vst [vmem:[%s251] sm:$0x1] %v1027
        $region52: #{tpu_custom_call.1} parent=35 // pred_fallthru
          _
        %s1029 = sand.u32 %s133, 1
        %s1030 = scalar_lea.sflag [#allocation8], %s1029
        %s1031 = sand.u32 %s133, 1
        %s1032 = scalar_lea.vmem [#allocation11], %s1031
        // Predicated region
        $region53: #{tpu_custom_call.1} parent=35 // pred_check
          %p1033 = pneg %p143
        $region54: #{tpu_custom_call.1} parent=35 // pred_check_branch
          %1035 = sbr.rel (%p1033) target = $region56
        $region55: #{tpu_custom_call.1} parent=35 // pred_region
          %s1037 = ssub.s32 16, 16
          %1038 = vsyncadd %s1030, %s1037
          %s1039 = smul.addr %s26, 16
          %s1040 = scalar_lea.hbm %s4, %s1039
          %s1042 = sshll.u32 %s1032, 4
          %s1043 = int_to_ptr.vmem [resolvable:$true] %s1042
          %1045 = dma.vmem_to_hbm [thread:$0]  %s1043, 16, %s1040, %s1030
        $region56: #{tpu_custom_call.1} parent=35 // pred_fallthru
          _
      $region36: #{tpu_custom_call.1} parent=5 // pred_fallthru
        _
      %p1046 = scmp.le.s32.totalorder 2, %s17
      // Predicated region
      $region57: #{tpu_custom_call.1} parent=5 // pred_check
        %p1047 = pneg %p1046
      $region58: #{tpu_custom_call.1} parent=5 // pred_check_branch
        %1049 = sbr.rel (%p1047) target = $region60
      $region59: #{tpu_custom_call.1} parent=5 // pred_region
        %s1050 = ssub.s32 %s17, 2
        // Predicated region
        $region61: #{tpu_custom_call.1} parent=59 // pred_check
          %p1051 = pneg %p149
        $region62: #{tpu_custom_call.1} parent=59 // pred_check_branch
          %1053 = sbr.rel (%p1051) target = $region64
        $region63: #{tpu_custom_call.1} parent=59 // pred_region
          %s1054 = sand.u32 %s134, 1
          %s1055 = scalar_lea.sflag [#allocation8], %s1054
          %s1056 = sand.u32 %s134, 1
          %s1057 = scalar_lea.vmem [#allocation11], %s1056
          %1058 = dma.done %s1055, 16
        $region64: #{tpu_custom_call.1} parent=59 // pred_fallthru
          _
      $region60: #{tpu_custom_call.1} parent=5 // pred_fallthru
        _
    $region6: #{tpu_custom_call.1} parent=1 // loop_footer
      %s21 = sadd.s32 1, %s17
    $region7: #{tpu_custom_call.1} parent=1 // loop_footer_branch
      %16 = sbr.rel target = $region3
    $region8: #{tpu_custom_call.1} parent=1 // loop_exit
      _
    %1059 = vsyncpa [#allocation7], 1
    %s1060 = scalar_lea.sflag [#allocation7], 1
    %1061 = vsyncpa %s1060, 1
    %1062 = vsyncpa [#allocation10], 1
    %1063 = vsyncpa [#allocation8], 1
    %s1064 = scalar_lea.sflag [#allocation8], 1
    %1065 = vsyncpa %s1064, 1

</llo_original>
